<compile_context>
chip_gen: v7x
topology: tpu7x:2x2x1
jax: 0.10.0
libtpu: 0.0.40
codegen_flags: <defaults>
</compile_context>

<pallas_src>
import functools

import jax
import jax.numpy as jnp
from jax.experimental import pallas as pl
from jax.experimental.pallas import tpu as pltpu

_LANES = 128
_MAX_TILE_ROWS = 2048  # (2048,128) f32 tile = 1 MiB; 2 inputs x 2 bufs + 2 scratch ~ 6 MiB


def _softplus_neg_abs(x):
    # log(1 + exp(-|x|)); exp/log both have guaranteed Mosaic lowerings (EUP).
    return jnp.log(1.0 + jnp.exp(-jnp.abs(x)))


def _adaptive_sa_gen_loss_kernel(nvalid_ref, dm_ref, dp_ref, m_ref, p_ref,
                                 out_ref, acc_map_ref, acc_pt_ref,
                                 *, alpha, needs_mask):
    """Gridded kernel: per-tile BCE-with-logits partial sums + final reduce."""
    pid = pl.program_id(0)
    nprog = pl.num_programs(0)
    is_last = pid == nprog - 1

    @pl.when(pid == 0)
    def _():
        acc_map_ref[...] = jnp.zeros_like(acc_map_ref)
        acc_pt_ref[...] = jnp.zeros_like(acc_pt_ref)
        out_ref[...] = jnp.zeros_like(out_ref)

    m = m_ref[...].astype(jnp.float32)          # fake_mpred tile (tile_rows, 128)
    p = p_ref[...].astype(jnp.float32)          # fake_ppred tile (tile_rows, 128)

    # BCEWithLogitsLoss(x, z) = max(x, 0) - x*z + log(1 + exp(-|x|)).
    # map loss: target = 1  ->  softplus(-x) = max(-x, 0) + log(1 + exp(-|x|)).
    map_elem = jnp.maximum(-m, 0.0) + _softplus_neg_abs(m)
    # point loss: logits = fake_ppred, target = fake_mpred (raw logits, exactly
    # as the reference PyTorch code does).
    pt_elem = jnp.maximum(p, 0.0) - p * m + _softplus_neg_abs(p)

    @pl.when(jnp.logical_not(is_last))
    def _():
        # Full tiles: pure VPU accumulation, no masking, no reduction.
        acc_map_ref[...] += map_elem
        acc_pt_ref[...] += pt_elem

    @pl.when(is_last)
    def _():
        if needs_mask:
            # Last tile may contain tail padding and/or block overhang past the
            # slab: mask by flat element index < n_valid (NaN/garbage in the
            # unselected branch of where() is value-selected away).
            rows, lanes = map_elem.shape
            base = pid * (rows * lanes)
            flat_idx = (jax.lax.broadcasted_iota(jnp.int32, (rows, lanes), 0) * lanes
                        + jax.lax.broadcasted_iota(jnp.int32, (rows, lanes), 1)
                        + base)
            mask = flat_idx < nvalid_ref[0]
            zero = jnp.zeros_like(map_elem)
            acc_map_ref[...] += jnp.where(mask, map_elem, zero)
            acc_pt_ref[...] += jnp.where(mask, pt_elem, zero)
        else:
            acc_map_ref[...] += map_elem
            acc_pt_ref[...] += pt_elem

        # Single cross-lane/sublane reduction for the whole input.
        inv_n = 1.0 / nvalid_ref[0].astype(jnp.float32)
        map_loss = jnp.sum(acc_map_ref[...]) * inv_n
        point_loss = jnp.sum(acc_pt_ref[...]) * inv_n

        dm = dm_ref[0]
        dp = dp_ref[0]
        denom = dp + alpha * dm
        loss = (alpha * dm / denom) * map_loss + (dp / denom) * point_loss
        out_ref[...] = jnp.full((1, 1), loss, dtype=out_ref.dtype)


def adaptive_sa_generator_loss(fake_mpred, fake_ppred, d_mloss, d_ploss,
                               alpha: float = 3.0):
    """JAX/Pallas equivalent of AdaptiveSAGeneratorLoss.forward (returns scalar)."""
    n = int(fake_mpred.size)
    assert int(fake_ppred.size) == n, "fake_mpred / fake_ppred must match in size"

    rows = pl.cdiv(n, _LANES)
    padded = rows * _LANES

    m_flat = fake_mpred.reshape(-1)
    p_flat = fake_ppred.reshape(-1)
    if padded != n:
        # Only a <128-element tail pad in the NATIVE dtype (no f32 upcast copy).
        m_flat = jnp.pad(m_flat, (0, padded - n))
        p_flat = jnp.pad(p_flat, (0, padded - n))
    m2d = m_flat.reshape(rows, _LANES)
    p2d = p_flat.reshape(rows, _LANES)

    if rows <= _MAX_TILE_ROWS:
        tile_rows = rows                        # single tile == full dims (always legal)
    else:
        tile_rows = _MAX_TILE_ROWS              # multiple of 8/16/32 -> legal block
    grid = (pl.cdiv(rows, tile_rows),)
    needs_mask = (padded != n) or (rows % tile_rows != 0)

    nvalid = jnp.asarray([n], jnp.int32)
    dm = jnp.asarray(d_mloss, jnp.float32).reshape(1)
    dp = jnp.asarray(d_ploss, jnp.float32).reshape(1)

    kernel = functools.partial(_adaptive_sa_gen_loss_kernel,
                               alpha=float(alpha), needs_mask=bool(needs_mask))

    out = pl.pallas_call(
        kernel,
        out_shape=jax.ShapeDtypeStruct((1, 1), jnp.float32),
        grid=grid,
        in_specs=[
            pl.BlockSpec(memory_space=pltpu.MemorySpace.SMEM),       # n_valid
            pl.BlockSpec(memory_space=pltpu.MemorySpace.SMEM),       # d_mloss
            pl.BlockSpec(memory_space=pltpu.MemorySpace.SMEM),       # d_ploss
            pl.BlockSpec((tile_rows, _LANES), lambda i: (i, 0)),     # fake_mpred slab
            pl.BlockSpec((tile_rows, _LANES), lambda i: (i, 0)),     # fake_ppred slab
        ],
        out_specs=pl.BlockSpec((1, 1), lambda i: (0, 0)),
        scratch_shapes=[
            pltpu.VMEM((tile_rows, _LANES), jnp.float32),            # map accumulator
            pltpu.VMEM((tile_rows, _LANES), jnp.float32),            # point accumulator
        ],
        compiler_params=pltpu.CompilerParams(
            dimension_semantics=("arbitrary",),
            vmem_limit_bytes=32 * 1024 * 1024,
        ),
    )(nvalid, dm, dp, m2d, p2d)
    return out[0, 0]


def _reference(fake_mpred, fake_ppred, d_mloss, d_ploss, alpha=3.0):
    """Pure-JAX reference for validation."""
    def bce_with_logits(x, z):
        return jnp.mean(jnp.maximum(x, 0.0) - x * z + jnp.log1p(jnp.exp(-jnp.abs(x))))

    map_loss = bce_with_logits(fake_mpred, jnp.ones_like(fake_mpred))
    point_loss = bce_with_logits(fake_ppred, fake_mpred)
    denom = d_ploss + alpha * d_mloss
    return (alpha * d_mloss / denom) * map_loss + (d_ploss / denom) * point_loss


if __name__ == "__main__":
    key = jax.random.PRNGKey(0)
    k1, k2, k3, k4 = jax.random.split(key, 4)

    # Discriminator logits over a map: (B, C, H, W) = (2, 1, 16, 16)
    fake_mpred = jax.random.normal(k1, (2, 1, 16, 16), dtype=jnp.float32)
    fake_ppred = jax.random.normal(k2, (2, 1, 16, 16), dtype=jnp.float32)
    # Scalar discriminator losses (positive).
    d_mloss = jax.random.uniform(k3, (), minval=0.1, maxval=1.0, dtype=jnp.float32)
    d_ploss = jax.random.uniform(k4, (), minval=0.1, maxval=1.0, dtype=jnp.float32)

    loss = adaptive_sa_generator_loss(fake_mpred, fake_ppred, d_mloss, d_ploss,
                                      alpha=3.0)
    loss = jax.block_until_ready(loss)

    ref = _reference(fake_mpred.astype(jnp.float32),
                     fake_ppred.astype(jnp.float32),
                     d_mloss, d_ploss, alpha=3.0)
    assert jnp.allclose(loss, ref, rtol=1e-5, atol=1e-6), (loss, ref)

    print("KERNEL_OK")
</pallas_src>

<mosaic_0001>
module attributes {stable_mosaic.version = 11 : i64} {
  func.func @_adaptive_sa_gen_loss_kernel(%arg0: i32, %arg1: memref<1xi32, #tpu.memory_space<smem>>, %arg2: memref<1xf32, #tpu.memory_space<smem>>, %arg3: memref<1xf32, #tpu.memory_space<smem>>, %arg4: memref<4x128xf32, #tpu.memory_space<vmem>>, %arg5: memref<4x128xf32, #tpu.memory_space<vmem>>, %arg6: memref<1x1xf32, #tpu.memory_space<vmem>>, %arg7: memref<4x128xf32, #tpu.memory_space<vmem>>, %arg8: memref<4x128xf32, #tpu.memory_space<vmem>>) attributes {dimension_semantics = [#tpu.dimension_semantics<arbitrary>], iteration_bounds = array<i64: 1>, scalar_prefetch = 0 : i64, scratch_operands = 2 : i64, tpu.core_type = #tpu.core_type<tc>, window_params = [{transform_indices = @transform_0, window_bounds = array<i64: 1>}, {transform_indices = @transform_1, window_bounds = array<i64: 1>}, {transform_indices = @transform_2, window_bounds = array<i64: 1>}, {transform_indices = @transform_3, window_bounds = array<i64: 4, 128>}, {transform_indices = @transform_4, window_bounds = array<i64: 4, 128>}, {pipeline_mode = #tpu.pipeline_mode<synchronous>, transform_indices = @transform_5, window_bounds = array<i64: 1, 1>}]} {
    %c0_i32 = arith.constant 0 : i32
    %0 = arith.cmpi eq, %arg0, %c0_i32 : i32
    %c0_i32_0 = arith.constant 0 : i32
    %1 = arith.cmpi eq, %arg0, %c0_i32_0 : i32
    %2 = arith.extui %1 : i1 to i32
    %c0_i32_1 = arith.constant 0 : i32
    %3 = arith.cmpi ne, %2, %c0_i32_1 : i32
    scf.if %3 {
      %cst_13 = arith.constant 0.000000e+00 : f32
      %35 = vector.broadcast %cst_13 : f32 to vector<4x128xf32>
      %c0_14 = arith.constant 0 : index
      %c0_15 = arith.constant 0 : index
      %36 = vector.load %arg7[%c0_14, %c0_15] : memref<4x128xf32, #tpu.memory_space<vmem>>, vector<4x128xf32>
      tpu.vector_store %arg7[%c0_14, %c0_15], %35 {strides = array<i32>} : memref<4x128xf32, #tpu.memory_space<vmem>>, vector<4x128xf32>,
      %cst_16 = arith.constant 0.000000e+00 : f32
      %37 = vector.broadcast %cst_16 : f32 to vector<4x128xf32>
      %c0_17 = arith.constant 0 : index
      %c0_18 = arith.constant 0 : index
      %38 = vector.load %arg8[%c0_17, %c0_18] : memref<4x128xf32, #tpu.memory_space<vmem>>, vector<4x128xf32>
      tpu.vector_store %arg8[%c0_17, %c0_18], %37 {strides = array<i32>} : memref<4x128xf32, #tpu.memory_space<vmem>>, vector<4x128xf32>,
      %cst_19 = arith.constant 0.000000e+00 : f32
      %39 = vector.broadcast %cst_19 : f32 to vector<1x1xf32>
      %c0_20 = arith.constant 0 : index
      %c0_21 = arith.constant 0 : index
      %40 = vector.load %arg6[%c0_20, %c0_21] : memref<1x1xf32, #tpu.memory_space<vmem>>, vector<1x1xf32>
      tpu.vector_store %arg6[%c0_20, %c0_21], %39 {strides = array<i32>} : memref<1x1xf32, #tpu.memory_space<vmem>>, vector<1x1xf32>,
    } else {
    }
    %c0 = arith.constant 0 : index
    %c0_2 = arith.constant 0 : index
    %4 = vector.load %arg4[%c0, %c0_2] : memref<4x128xf32, #tpu.memory_space<vmem>>, vector<4x128xf32>
    %c0_3 = arith.constant 0 : index
    %c0_4 = arith.constant 0 : index
    %5 = vector.load %arg5[%c0_3, %c0_4] : memref<4x128xf32, #tpu.memory_space<vmem>>, vector<4x128xf32>
    %cst = arith.constant 0.000000e+00 : f32
    %6 = vector.broadcast %cst : f32 to vector<4x128xf32>
    %7 = arith.subf %6, %4 : vector<4x128xf32>
    %cst_5 = arith.constant 0.000000e+00 : f32
    %8 = vector.broadcast %cst_5 : f32 to vector<4x128xf32>
    %9 = arith.maximumf %7, %8 : vector<4x128xf32>
    %10 = math.absf %4 : vector<4x128xf32>
    %cst_6 = arith.constant 0.000000e+00 : f32
    %11 = vector.broadcast %cst_6 : f32 to vector<4x128xf32>
    %12 = arith.subf %11, %10 : vector<4x128xf32>
    %13 = math.exp %12 : vector<4x128xf32>
    %cst_7 = arith.constant 1.000000e+00 : f32
    %14 = vector.broadcast %cst_7 : f32 to vector<4x128xf32>
    %15 = arith.addf %14, %13 : vector<4x128xf32>
    %16 = math.log %15 : vector<4x128xf32>
    %17 = arith.addf %9, %16 : vector<4x128xf32>
    %cst_8 = arith.constant 0.000000e+00 : f32
    %18 = vector.broadcast %cst_8 : f32 to vector<4x128xf32>
    %19 = arith.maximumf %5, %18 : vector<4x128xf32>
    %20 = arith.mulf %5, %4 : vector<4x128xf32>
    %21 = arith.subf %19, %20 : vector<4x128xf32>
    %22 = math.absf %5 : vector<4x128xf32>
    %cst_9 = arith.constant 0.000000e+00 : f32
    %23 = vector.broadcast %cst_9 : f32 to vector<4x128xf32>
    %24 = arith.subf %23, %22 : vector<4x128xf32>
    %25 = math.exp %24 : vector<4x128xf32>
    %cst_10 = arith.constant 1.000000e+00 : f32
    %26 = vector.broadcast %cst_10 : f32 to vector<4x128xf32>
    %27 = arith.addf %26, %25 : vector<4x128xf32>
    %28 = math.log %27 : vector<4x128xf32>
    %29 = arith.addf %21, %28 : vector<4x128xf32>
    %true = arith.constant true
    %30 = arith.xori %0, %true : i1
    %31 = arith.extui %30 : i1 to i32
    %c0_i32_11 = arith.constant 0 : i32
    %32 = arith.cmpi ne, %31, %c0_i32_11 : i32
    scf.if %32 {
      %c0_13 = arith.constant 0 : index
      %c0_14 = arith.constant 0 : index
      %35 = vector.load %arg7[%c0_13, %c0_14] : memref<4x128xf32, #tpu.memory_space<vmem>>, vector<4x128xf32>
      %36 = arith.addf %35, %17 : vector<4x128xf32>
      %c0_15 = arith.constant 0 : index
      %c0_16 = arith.constant 0 : index
      %37 = vector.load %arg7[%c0_15, %c0_16] : memref<4x128xf32, #tpu.memory_space<vmem>>, vector<4x128xf32>
      tpu.vector_store %arg7[%c0_15, %c0_16], %36 {strides = array<i32>} : memref<4x128xf32, #tpu.memory_space<vmem>>, vector<4x128xf32>,
      %c0_17 = arith.constant 0 : index
      %c0_18 = arith.constant 0 : index
      %38 = vector.load %arg8[%c0_17, %c0_18] : memref<4x128xf32, #tpu.memory_space<vmem>>, vector<4x128xf32>
      %39 = arith.addf %38, %29 : vector<4x128xf32>
      %c0_19 = arith.constant 0 : index
      %c0_20 = arith.constant 0 : index
      %40 = vector.load %arg8[%c0_19, %c0_20] : memref<4x128xf32, #tpu.memory_space<vmem>>, vector<4x128xf32>
      tpu.vector_store %arg8[%c0_19, %c0_20], %39 {strides = array<i32>} : memref<4x128xf32, #tpu.memory_space<vmem>>, vector<4x128xf32>,
    } else {
    }
    %33 = arith.extui %0 : i1 to i32
    %c0_i32_12 = arith.constant 0 : i32
    %34 = arith.cmpi ne, %33, %c0_i32_12 : i32
    scf.if %34 {
      %c0_13 = arith.constant 0 : index
      %c0_14 = arith.constant 0 : index
      %35 = vector.load %arg7[%c0_13, %c0_14] : memref<4x128xf32, #tpu.memory_space<vmem>>, vector<4x128xf32>
      %36 = arith.addf %35, %17 : vector<4x128xf32>
      %c0_15 = arith.constant 0 : index
      %c0_16 = arith.constant 0 : index
      %37 = vector.load %arg7[%c0_15, %c0_16] : memref<4x128xf32, #tpu.memory_space<vmem>>, vector<4x128xf32>
      tpu.vector_store %arg7[%c0_15, %c0_16], %36 {strides = array<i32>} : memref<4x128xf32, #tpu.memory_space<vmem>>, vector<4x128xf32>,
      %c0_17 = arith.constant 0 : index
      %c0_18 = arith.constant 0 : index
      %38 = vector.load %arg8[%c0_17, %c0_18] : memref<4x128xf32, #tpu.memory_space<vmem>>, vector<4x128xf32>
      %39 = arith.addf %38, %29 : vector<4x128xf32>
      %c0_19 = arith.constant 0 : index
      %c0_20 = arith.constant 0 : index
      %40 = vector.load %arg8[%c0_19, %c0_20] : memref<4x128xf32, #tpu.memory_space<vmem>>, vector<4x128xf32>
      tpu.vector_store %arg8[%c0_19, %c0_20], %39 {strides = array<i32>} : memref<4x128xf32, #tpu.memory_space<vmem>>, vector<4x128xf32>,
      %c0_21 = arith.constant 0 : index
      %41 = memref.load %arg1[%c0_21] : memref<1xi32, #tpu.memory_space<smem>>
      %42 = arith.sitofp %41 : i32 to f32
      %cst_22 = arith.constant 1.000000e+00 : f32
      %43 = arith.divf %cst_22, %42 : f32
      %c0_23 = arith.constant 0 : index
      %c0_24 = arith.constant 0 : index
      %44 = vector.load %arg7[%c0_23, %c0_24] : memref<4x128xf32, #tpu.memory_space<vmem>>, vector<4x128xf32>
      %45 = vector.shape_cast %44 : vector<4x128xf32> to vector<1x4x128xf32>
      %cst_25 = arith.constant dense<0.000000e+00> : vector<1xf32>
      %46 = vector.multi_reduction <add>, %45, %cst_25 [1, 2] : vector<1x4x128xf32> to vector<1xf32>
      %47 = vector.shape_cast %46 : vector<1xf32> to vector<1x1x1xf32>
      %48 = vector.extract %47[0, 0, 0] : f32 from vector<1x1x1xf32>
      %49 = arith.mulf %48, %43 : f32
      %c0_26 = arith.constant 0 : index
      %c0_27 = arith.constant 0 : index
      %50 = vector.load %arg8[%c0_26, %c0_27] : memref<4x128xf32, #tpu.memory_space<vmem>>, vector<4x128xf32>
      %51 = vector.shape_cast %50 : vector<4x128xf32> to vector<1x4x128xf32>
      %cst_28 = arith.constant dense<0.000000e+00> : vector<1xf32>
      %52 = vector.multi_reduction <add>, %51, %cst_28 [1, 2] : vector<1x4x128xf32> to vector<1xf32>
      %53 = vector.shape_cast %52 : vector<1xf32> to vector<1x1x1xf32>
      %54 = vector.extract %53[0, 0, 0] : f32 from vector<1x1x1xf32>
      %55 = arith.mulf %54, %43 : f32
      %c0_29 = arith.constant 0 : index
      %56 = memref.load %arg2[%c0_29] : memref<1xf32, #tpu.memory_space<smem>>
      %c0_30 = arith.constant 0 : index
      %57 = memref.load %arg3[%c0_30] : memref<1xf32, #tpu.memory_space<smem>>
      %cst_31 = arith.constant 3.000000e+00 : f32
      %58 = arith.mulf %cst_31, %56 : f32
      %59 = arith.addf %57, %58 : f32
      %cst_32 = arith.constant 3.000000e+00 : f32
      %60 = arith.mulf %cst_32, %56 : f32
      %61 = arith.divf %60, %59 : f32
      %62 = arith.mulf %61, %49 : f32
      %63 = arith.divf %57, %59 : f32
      %64 = arith.mulf %63, %55 : f32
      %65 = arith.addf %62, %64 : f32
      %66 = vector.broadcast %65 : f32 to vector<1x1xf32>
      %c0_33 = arith.constant 0 : index
      %c0_34 = arith.constant 0 : index
      %67 = vector.load %arg6[%c0_33, %c0_34] : memref<1x1xf32, #tpu.memory_space<vmem>>, vector<1x1xf32>
      tpu.vector_store %arg6[%c0_33, %c0_34], %66 {strides = array<i32>} : memref<1x1xf32, #tpu.memory_space<vmem>>, vector<1x1xf32>,
    } else {
    }
    return
  }
  func.func @transform_0(%arg0: i32) -> i32 {
    %c0_i32 = arith.constant 0 : i32
    %c0_i32_0 = arith.constant 0 : i32
    return %c0_i32 : i32
  }
  func.func @transform_1(%arg0: i32) -> i32 {
    %c0_i32 = arith.constant 0 : i32
    %c0_i32_0 = arith.constant 0 : i32
    return %c0_i32 : i32
  }
  func.func @transform_2(%arg0: i32) -> i32 {
    %c0_i32 = arith.constant 0 : i32
    %c0_i32_0 = arith.constant 0 : i32
    return %c0_i32 : i32
  }
  func.func @transform_3(%arg0: i32) -> (i32, i32) {
    %c0_i32 = arith.constant 0 : i32
    %c0_i32_0 = arith.constant 0 : i32
    return %arg0, %c0_i32 : i32, i32
  }
  func.func @transform_4(%arg0: i32) -> (i32, i32) {
    %c0_i32 = arith.constant 0 : i32
    %c0_i32_0 = arith.constant 0 : i32
    return %arg0, %c0_i32 : i32, i32
  }
  func.func @transform_5(%arg0: i32) -> (i32, i32) {
    %c0_i32 = arith.constant 0 : i32
    %c0_i32_0 = arith.constant 0 : i32
    %c0_i32_1 = arith.constant 0 : i32
    return %c0_i32, %c0_i32_0 : i32, i32
  }
}

</mosaic_0001>

<llo_original>
// kernel: tpu_custom_call.1
$region0: #{tpu_custom_call.1}
  #allocation0 [shape = 'u32[]', space=smem, size = 0x4, offset = 0x4, fixed_abs, tag = 'smem constant byte address 0x4 - core index']
  #allocation1 [shape = 'u32[144,128]{1,0:T(1,128)}', space=vmem, size = 0x12000, scoped, tag = 'internal scratch']
  #allocation2 [shape = 'f32[4,128]{1,0:T(4,128)}', space=vmem, size = 0x800, scoped, tag = 'scratch operand']
  #allocation3 [shape = 'f32[4,128]{1,0:T(4,128)}', space=vmem, size = 0x800, scoped, tag = 'scratch operand']
  #allocation4 [shape = 's32[1]{0:T(128)S(6)}', space=smem, size = 0x200, scoped, tag = 'scoped memory for tpu_custom_call.1']
  #allocation5 [shape = 'f32[1]{0:T(128)S(6)}', space=smem, size = 0x200, scoped, tag = 'scoped memory for tpu_custom_call.1']
  #allocation6 [shape = 'f32[1]{0:T(128)S(6)}', space=smem, size = 0x200, scoped, tag = 'scoped memory for tpu_custom_call.1']
  %s0 = inlined_call_operand.<no memory space> [shape: s32[1], index: 0, kind: input, shape index: {}]
  %s1 = inlined_call_operand.<no memory space> [shape: f32[1], index: 1, kind: input, shape index: {}]
  %s2 = inlined_call_operand.<no memory space> [shape: f32[1], index: 2, kind: input, shape index: {}]
  %s3 = inlined_call_operand.vmem [shape: f32[4,128], index: 3, kind: input, shape index: {}]
  %s4 = inlined_call_operand.vmem [shape: f32[4,128], index: 4, kind: input, shape index: {}]
  %s5 = inlined_call_operand.hbm [shape: f32[1,1], index: 5, kind: output, shape index: {}]
  %s6 = sld [smem:[#allocation0]]
  $region42: #{tpu_custom_call.1} parent=0
    _
  %s8 = ssub.s32 1, %s6
  %s9 = scalar_select 0, %s8, %s6
  %10 = sst [smem:[#allocation4]] %s0
  %11 = sst [smem:[#allocation5]] %s1
  %12 = sst [smem:[#allocation6]] %s2
  $region1: #{tpu_custom_call.1} parent=0
    #allocation7 [shape = 'u8[512]{0}', space=vmem, size = 0x400, scoped, tag = 'output window, operand 0, single buffered']
    #allocation8 [shape = 's32[1]{0}', space=sflag, size = 0x4, scoped, tag = 'scoped memory for tpu_custom_call.1']
    %13 = vsyncpa [#allocation8], 0
    // Predicated region
    $region2: #{tpu_custom_call.1} parent=1 // pred_check
      _
    $region3: #{tpu_custom_call.1} parent=1 // pred_check_branch
      %15 = sbr.rel (0) target = $region5
    $region4: #{tpu_custom_call.1} parent=1 // pred_region
      _
    $region5: #{tpu_custom_call.1} parent=1 // pred_fallthru
      _
    // Predicated region
    $region6: #{tpu_custom_call.1} parent=1 // pred_check
      _
    $region7: #{tpu_custom_call.1} parent=1 // pred_check_branch
      %17 = sbr.rel (0) target = $region9
    $region8: #{tpu_custom_call.1} parent=1 // pred_region
      _
    $region9: #{tpu_custom_call.1} parent=1 // pred_fallthru
      _
    // Predicated region
    $region10: #{tpu_custom_call.1} parent=1 // pred_check
      _
    $region11: #{tpu_custom_call.1} parent=1 // pred_check_branch
      %19 = sbr.rel (0) target = $region13
    $region12: #{tpu_custom_call.1} parent=1 // pred_region
      _
    $region13: #{tpu_custom_call.1} parent=1 // pred_fallthru
      _
    // Predicated region
    $region14: #{tpu_custom_call.1} parent=1 // pred_check
      _
    $region15: #{tpu_custom_call.1} parent=1 // pred_check_branch
      %21 = sbr.rel (0) target = $region17
    $region16: #{tpu_custom_call.1} parent=1 // pred_region
      _
    $region17: #{tpu_custom_call.1} parent=1 // pred_fallthru
      _
    // Predicated region
    $region18: #{tpu_custom_call.1} parent=1 // pred_check
      _
    $region19: #{tpu_custom_call.1} parent=1 // pred_check_branch
      %23 = sbr.rel (0) target = $region21
    $region20: #{tpu_custom_call.1} parent=1 // pred_region
      _
    $region21: #{tpu_custom_call.1} parent=1 // pred_fallthru
      _
    %p24 = scmp.eq.s32.totalorder 0, 0
    // Predicated region
    $region22: #{tpu_custom_call.1} parent=1 // pred_check
      %p25 = pneg %p24
    $region23: #{tpu_custom_call.1} parent=1 // pred_check_branch
      %27 = sbr.rel (%p25) target = $region25
    $region24: #{tpu_custom_call.1} parent=1 // pred_region
      %28 = vst [vmem:[#allocation2] sm:$0xf] 0.0
      %29 = vst [vmem:[#allocation3] sm:$0xf] 0.0
      %vm30 = vcmask 0
      %31 = vst.msk [vmem:[#allocation7] sm:$0x1] %vm30, 0.0
    $region25: #{tpu_custom_call.1} parent=1 // pred_fallthru
      _
    %v32 = vld [vmem:[%s3] sm:$0xf]
    %v33 = vld [vmem:[%s4] sm:$0xf]
    %v34 = vsub.f32 0.0, %v32
    %v35 = vmax.f32 %v34, 0.0
    %v36 = vand.u32 2147483647, %v32
    %v37 = vsub.f32 0.0, %v36
    %v38 = vmul.f32 %v37, 1.442695
    %v39 = vpow.pop %v38
    %v40 = vadd.f32 %v39, 1.0
    %v41 = vlog2.pop %v40
    %v42 = vmul.f32 %v41, 0.6931472
    %v43 = vadd.f32 %v35, %v42
    %v44 = vmax.f32 %v33, 0.0
    %v45 = vmul.f32 %v33, %v32
    %v46 = vsub.f32 %v44, %v45
    %v47 = vand.u32 2147483647, %v33
    %v48 = vsub.f32 0.0, %v47
    %v49 = vmul.f32 %v48, 1.442695
    %v50 = vpow.pop %v49
    %v51 = vadd.f32 %v50, 1.0
    %v52 = vlog2.pop %v51
    %v53 = vmul.f32 %v52, 0.6931472
    %v54 = vadd.f32 %v46, %v53
    %p55 = scmp.ne.s32.totalorder 0, 0
    // Predicated region
    $region26: #{tpu_custom_call.1} parent=1 // pred_check
      %p56 = pneg %p55
    $region27: #{tpu_custom_call.1} parent=1 // pred_check_branch
      %58 = sbr.rel (%p56) target = $region29
    $region28: #{tpu_custom_call.1} parent=1 // pred_region
      %v59 = vld [vmem:[#allocation2] sm:$0xf]
      %v60 = vadd.f32 %v59, %v43
      %61 = vst [vmem:[#allocation2] sm:$0xf] %v60
      %v62 = vld [vmem:[#allocation3] sm:$0xf]
      %v63 = vadd.f32 %v62, %v54
      %64 = vst [vmem:[#allocation3] sm:$0xf] %v63
    $region29: #{tpu_custom_call.1} parent=1 // pred_fallthru
      _
    // Predicated region
    $region30: #{tpu_custom_call.1} parent=1 // pred_check
      %p65 = pneg %p24
    $region31: #{tpu_custom_call.1} parent=1 // pred_check_branch
      %67 = sbr.rel (%p65) target = $region33
    $region32: #{tpu_custom_call.1} parent=1 // pred_region
      %v68 = vld [vmem:[#allocation2] sm:$0xf]
      %v69 = vadd.f32 %v68, %v43
      %70 = vst [vmem:[#allocation2] sm:$0xf] %v69
      %v71 = vld [vmem:[#allocation3] sm:$0xf]
      %v72 = vadd.f32 %v71, %v54
      %73 = vst [vmem:[#allocation3] sm:$0xf] %v72
      %s74 = sld [smem:[#allocation4]]
      %s75 = scvt.s32.f32 %s74
      %v76 = vstv %s75
      %v77 = vrcp.pop %v76
      %s78 = vtos %v77
      %v79 = vld [vmem:[#allocation2] sm:$0xf]
      %vm80 = vcmask 1043456
      %v81 = vsel %vm80, %v79, 0.0
      %82 = vadd.xlane.f32.xlu0 %v81
      %v83 = vpop.xlane.xlu0 %82
      %v84 = vrot.slane %v83, 4
      %v85 = vadd.f32 %v83, %v84
      %v86 = vrot.slane %v85, 2
      %v87 = vadd.f32 %v85, %v86
      %v88 = vrot.slane %v87, 1
      %v89 = vadd.f32 %v87, %v88
      %s90 = vtos %v89
      %s91 = smul.f32 %s90, %s78
      %v92 = vld [vmem:[#allocation3] sm:$0xf]
      %v93 = vsel %vm80, %v92, 0.0
      %94 = vadd.xlane.f32.xlu0 %v93
      %v95 = vpop.xlane.xlu0 %94
      %v96 = vrot.slane %v95, 4
      %v97 = vadd.f32 %v95, %v96
      %v98 = vrot.slane %v97, 2
      %v99 = vadd.f32 %v97, %v98
      %v100 = vrot.slane %v99, 1
      %v101 = vadd.f32 %v99, %v100
      %s102 = vtos %v101
      %s103 = smul.f32 %s102, %s78
      %s104 = sld [smem:[#allocation5]]
      %s105 = sld [smem:[#allocation6]]
      %s106 = smul.f32 %s104, 3.0
      %s107 = sadd.f32 %s105, %s106
      %v108 = vstv %s107
      %v109 = vrcp.pop %v108
      %s110 = vtos %v109
      %s111 = smul.f32 %s106, %s110
      %s112 = smul.f32 %s111, %s91
      %v113 = vstv %s107
      %v114 = vrcp.pop %v113
      %s115 = vtos %v114
      %s116 = smul.f32 %s105, %s115
      %s117 = smul.f32 %s116, %s103
      %s118 = sadd.f32 %s112, %s117
      %v119 = vstv %s118
      %vm120 = vcmask 0
      %121 = vst.msk [vmem:[#allocation7] sm:$0x1] %vm120, %v119
    $region33: #{tpu_custom_call.1} parent=1 // pred_fallthru
      _
    // Predicated region
    $region34: #{tpu_custom_call.1} parent=1 // pred_check
      _
    $region35: #{tpu_custom_call.1} parent=1 // pred_check_branch
      %123 = sbr.rel (0) target = $region37
    $region36: #{tpu_custom_call.1} parent=1 // pred_region
      %s125 = ssub.s32 16, 16
      %126 = vsyncadd [#allocation8], %s125
      %s128 = sshll.u32 [#allocation7], 4
      %s129 = int_to_ptr.vmem [resolvable:$true] %s128
      %131 = dma.vmem_to_hbm [thread:$0]  %s129, 16, %s5, [#allocation8]
    $region37: #{tpu_custom_call.1} parent=1 // pred_fallthru
      _
    // Predicated region
    $region38: #{tpu_custom_call.1} parent=1 // pred_check
      _
    $region39: #{tpu_custom_call.1} parent=1 // pred_check_branch
      %133 = sbr.rel (0) target = $region41
    $region40: #{tpu_custom_call.1} parent=1 // pred_region
      %134 = dma.done [#allocation8], 16
    $region41: #{tpu_custom_call.1} parent=1 // pred_fallthru
      _
    %135 = vsyncpa [#allocation8], 1

</llo_original>
